<compile_context>
chip_gen: v5e
topology: v5e:2x2
jax: 0.10.0
libtpu: 0.0.40
codegen_flags: <defaults>
</compile_context>

<pallas_src>
import functools

import jax
import jax.numpy as jnp
from jax.experimental import pallas as pl
from jax.experimental.pallas import tpu as pltpu


NC_PAD = 128   # lane-dense output width (n_classes padded to one full lane set)
LANE = 128


def _round_up(v, m):
    return ((v + m - 1) // m) * m


# ----------------------------------------------------------------------------- kernel
def gated_attn_kernel(x_ref, wab_ref, bab_ref, wc_ref, bc_ref, out_ref,
                      *, matmul_dtype, d_hidden):
    x = x_ref[...]                                         # (tn, L)
    wab = wab_ref[...]                                     # (L, 2*Dp) = [Wa | Wb]
    if matmul_dtype is not None:
        x = x.astype(matmul_dtype)
        wab = wab.astype(matmul_dtype)

    # Fused gate projection: one MXU stream for both gates, f32 accumulation.
    h = jnp.dot(x, wab, preferred_element_type=jnp.float32) + bab_ref[...]   # (tn, 2*Dp)
    a = jnp.tanh(h[:, :d_hidden])                          # (tn, Dp)   EUP, f32
    b = jax.nn.sigmoid(h[:, d_hidden:])                    # (tn, Dp)   EUP, f32
    ab = a * b                                             # gated features, f32

    wc = wc_ref[...]                                       # (Dp, NC_PAD) zero-padded
    if matmul_dtype is not None:
        ab = ab.astype(matmul_dtype)
        wc = wc.astype(matmul_dtype)

    A = jnp.dot(ab, wc, preferred_element_type=jnp.float32) + bc_ref[...]    # (tn, NC_PAD)
    out_ref[...] = A.astype(out_ref.dtype)


# ------------------------------------------------------------------- one-time param prep
def prepare_params(wa, ba, wb, bb, wc, bc):
    """Do layout plumbing once (outside the per-call hot path).

    wa/wb: (L, D), ba/bb: (1, D)  — Linear weights pre-transposed to [in, out]
    wc: (D, n_classes), bc: (1, n_classes)
    """
    L, D = wa.shape
    nc = wc.shape[1]
    assert nc <= NC_PAD, "n_classes > 128 not supported by the lane-padded path"

    # Pad D up to a multiple of 128 so the in-kernel gate split is lane-tile aligned.
    # Padded gate columns give tanh(0)=0 (and Wc's padded rows are zero), so the
    # result is unchanged.
    Dp = _round_up(D, LANE)
    if Dp != D:
        pad = Dp - D
        wa = jnp.pad(wa, ((0, 0), (0, pad)))
        ba = jnp.pad(ba, ((0, 0), (0, pad)))
        wb = jnp.pad(wb, ((0, 0), (0, pad)))
        bb = jnp.pad(bb, ((0, 0), (0, pad)))
        wc = jnp.pad(wc, ((0, pad), (0, 0)))

    wab = jnp.concatenate([wa, wb], axis=1)                # (L, 2*Dp)
    bab = jnp.concatenate([ba, bb], axis=1)                # (1, 2*Dp)

    # Lane-dense final projection: zero-pad n_classes up to 128 lanes.
    wc_p = jnp.zeros((Dp, NC_PAD), wc.dtype).at[:, :nc].set(wc)
    bc_p = jnp.zeros((1, NC_PAD), bc.dtype).at[:, :nc].set(bc)

    return {"wab": wab, "bab": bab, "wc": wc_p, "bc": bc_p,
            "n_classes": nc, "d_hidden": Dp, "L": L}


# ------------------------------------------------------------------------------ wrapper
def attn_net_gated_apply(x, params, *, tn=1024, matmul_dtype=jnp.bfloat16):
    """Pallas implementation of Attn_Net_Gated.forward. Returns (A, x)."""
    N, L = x.shape
    assert params["L"] == L
    wab, bab, wc_p, bc_p = params["wab"], params["bab"], params["wc"], params["bc"]
    nc, Dp = params["n_classes"], params["d_hidden"]

    # Row tile: multiple of 8.  No host-side padding of x — partial final block
    # is handled by Pallas (grid uses cdiv; OOB rows are independent and clipped
    # from the output write).
    tn = max(8, (int(tn) // 8) * 8)
    n8 = _round_up(max(N, 1), 8)
    tn = min(tn, n8)
    if n8 > 8:
        # Keep at least 2 grid steps so both v7x TensorCores get work.
        tn = min(tn, max(8, _round_up(pl.cdiv(N, 2), 8)))
    grid = (pl.cdiv(N, tn),)

    xbytes = x.dtype.itemsize
    wbytes = wab.dtype.itemsize
    # VMEM footprint: double-buffered x/out tiles + (double-buffered) weights.
    tile_bytes = 2 * tn * L * xbytes + 2 * tn * NC_PAD * xbytes
    weight_bytes = 2 * (wab.size + bab.size + wc_p.size + bc_p.size) * wbytes
    vmem_limit = int(min(max(2 * (tile_bytes + weight_bytes), 32 << 20), 48 << 20))

    cost = pl.CostEstimate(
        flops=2 * N * L * (2 * Dp) + 2 * N * Dp * NC_PAD,
        transcendentals=2 * N * Dp,
        bytes_accessed=N * L * xbytes + N * NC_PAD * xbytes + weight_bytes // 2,
    )

    A_p = pl.pallas_call(
        functools.partial(gated_attn_kernel, matmul_dtype=matmul_dtype, d_hidden=Dp),
        out_shape=jax.ShapeDtypeStruct((N, NC_PAD), x.dtype),
        grid_spec=pltpu.PrefetchScalarGridSpec(
            num_scalar_prefetch=0,
            grid=grid,
            in_specs=[
                pl.BlockSpec((tn, L), lambda i: (i, 0)),          # x tile
                pl.BlockSpec((L, 2 * Dp), lambda i: (0, 0)),      # [Wa|Wb] (full)
                pl.BlockSpec((1, 2 * Dp), lambda i: (0, 0)),      # [ba|bb]
                pl.BlockSpec((Dp, NC_PAD), lambda i: (0, 0)),     # Wc (lane-padded)
                pl.BlockSpec((1, NC_PAD), lambda i: (0, 0)),      # bc (lane-padded)
            ],
            out_specs=pl.BlockSpec((tn, NC_PAD), lambda i: (i, 0)),
        ),
        compiler_params=pltpu.CompilerParams(
            dimension_semantics=("parallel",),
            vmem_limit_bytes=vmem_limit,
        ),
        cost_estimate=cost,
    )(x, wab, bab, wc_p, bc_p)

    A = A_p[:, :nc]      # slice away padded classes; padded rows never written
    return A, x


def attn_net_gated(x, wa, ba, wb, bb, wc, bc, *, tn=1024, matmul_dtype=jnp.bfloat16):
    """One-shot convenience wrapper (prepares params every call; prefer
    prepare_params() + attn_net_gated_apply() in a training/inference loop)."""
    params = prepare_params(wa, ba, wb, bb, wc, bc)
    return attn_net_gated_apply(x, params, tn=tn, matmul_dtype=matmul_dtype)


# ---------------------------------------------------------------------------- reference
def reference(x, wa, ba, wb, bb, wc, bc):
    hi = jax.lax.Precision.HIGHEST
    a = jnp.tanh(jnp.dot(x, wa, precision=hi) + ba)
    b = jax.nn.sigmoid(jnp.dot(x, wb, precision=hi) + bb)
    return jnp.dot(a * b, wc, precision=hi) + bc


if __name__ == "__main__":
    # Small shapes consistent with the module (L, D scaled down from 1024/256).
    # N deliberately NOT a multiple of the tile or of 8.
    N, L, D, n_classes = 300, 256, 128, 1

    key = jax.random.PRNGKey(0)
    kx, kwa, kba, kwb, kbb, kwc, kbc = jax.random.split(key, 7)

    x = jax.random.normal(kx, (N, L), dtype=jnp.float32)
    # Deterministic synthetic init (xavier-ish); weights stored [in, out].
    wa = jax.random.normal(kwa, (L, D), dtype=jnp.float32) * (1.0 / jnp.sqrt(L))
    ba = jax.random.normal(kba, (1, D), dtype=jnp.float32) * 0.01
    wb = jax.random.normal(kwb, (L, D), dtype=jnp.float32) * (1.0 / jnp.sqrt(L))
    bb = jax.random.normal(kbb, (1, D), dtype=jnp.float32) * 0.01
    wc = jax.random.normal(kwc, (D, n_classes), dtype=jnp.float32) * (1.0 / jnp.sqrt(D))
    bc = jax.random.normal(kbc, (1, n_classes), dtype=jnp.float32) * 0.01
    # gamma = jnp.ones((1,))  # present in module __init__ but unused in forward.

    # One-time parameter prep (hoisted out of the per-call hot path).
    params = prepare_params(wa, ba, wb, bb, wc, bc)

    # Default fast path: bf16 MXU operands, f32 accumulation.
    A_bf16, x_out = attn_net_gated_apply(x, params, tn=1024)
    A_bf16 = jax.block_until_ready(A_bf16)
    x_out = jax.block_until_ready(x_out)

    # Exact-precision path: f32 MXU operands.
    A_f32, _ = attn_net_gated_apply(x, params, tn=128, matmul_dtype=None)
    A_f32 = jax.block_until_ready(A_f32)

    A_ref = reference(x, wa, ba, wb, bb, wc, bc)

    assert A_bf16.shape == (N, n_classes)
    assert A_f32.shape == (N, n_classes)
    assert x_out.shape == (N, L)
    assert jnp.allclose(A_f32, A_ref, atol=1e-4, rtol=1e-4), \
        float(jnp.abs(A_f32 - A_ref).max())
    assert jnp.allclose(A_bf16, A_ref, atol=5e-2, rtol=5e-2), \
        float(jnp.abs(A_bf16 - A_ref).max())
    assert jnp.array_equal(x_out, x)

    print("KERNEL_OK")
</pallas_src>

<mosaic_0001>
module attributes {stable_mosaic.version = 11 : i64} {
  func.func @gated_attn_kernel(%arg0: i32, %arg1: memref<152x256xf32, #tpu.memory_space<vmem>>, %arg2: memref<256x256xf32, #tpu.memory_space<vmem>>, %arg3: memref<1x256xf32, #tpu.memory_space<vmem>>, %arg4: memref<128x128xf32, #tpu.memory_space<vmem>>, %arg5: memref<1x128xf32, #tpu.memory_space<vmem>>, %arg6: memref<152x128xf32, #tpu.memory_space<vmem>>) attributes {dimension_semantics = [#tpu.dimension_semantics<parallel>], iteration_bounds = array<i64: 2>, scalar_prefetch = 0 : i64, scratch_operands = 0 : i64, tpu.core_type = #tpu.core_type<tc>, window_params = [{transform_indices = @transform_0, window_bounds = array<i64: 152, 256>}, {pipeline_mode = #tpu.pipeline_mode<synchronous>, transform_indices = @transform_1, window_bounds = array<i64: 256, 256>}, {pipeline_mode = #tpu.pipeline_mode<synchronous>, transform_indices = @transform_2, window_bounds = array<i64: 1, 256>}, {pipeline_mode = #tpu.pipeline_mode<synchronous>, transform_indices = @transform_3, window_bounds = array<i64: 128, 128>}, {pipeline_mode = #tpu.pipeline_mode<synchronous>, transform_indices = @transform_4, window_bounds = array<i64: 1, 128>}, {transform_indices = @transform_5, window_bounds = array<i64: 152, 128>}]} {
    %c0 = arith.constant 0 : index
    %c0_0 = arith.constant 0 : index
    %0 = vector.load %arg1[%c0, %c0_0] : memref<152x256xf32, #tpu.memory_space<vmem>>, vector<152x256xf32>
    %c0_1 = arith.constant 0 : index
    %c0_2 = arith.constant 0 : index
    %1 = vector.load %arg2[%c0_1, %c0_2] : memref<256x256xf32, #tpu.memory_space<vmem>>, vector<256x256xf32>
    %2 = arith.truncf %0 : vector<152x256xf32> to vector<152x256xbf16>
    %3 = arith.truncf %1 : vector<256x256xf32> to vector<256x256xbf16>
    %cst = arith.constant dense<0.000000e+00> : vector<152x256xf32>
    %4 = tpu.matmul %2, %3, %cst {dimension_numbers = #tpu.dot_dimension_numbers<[1], [0], [0], [1], [0, 0, 1, 1], [], []>} : vector<152x256xbf16>, vector<256x256xbf16>, vector<152x256xf32> -> vector<152x256xf32>
    %c0_3 = arith.constant 0 : index
    %c0_4 = arith.constant 0 : index
    %5 = vector.load %arg3[%c0_3, %c0_4] : memref<1x256xf32, #tpu.memory_space<vmem>>, vector<1x256xf32>
    %6 = vector.broadcast %5 : vector<1x256xf32> to vector<152x256xf32>
    %7 = arith.addf %4, %6 : vector<152x256xf32>
    %8 = vector.extract_strided_slice %7 {offsets = [0, 0], sizes = [152, 128], strides = [1, 1]} : vector<152x256xf32> to vector<152x128xf32>
    %9 = math.tanh %8 : vector<152x128xf32>
    %10 = vector.extract_strided_slice %7 {offsets = [0, 128], sizes = [152, 128], strides = [1, 1]} : vector<152x256xf32> to vector<152x128xf32>
    %11 = arith.negf %10 : vector<152x128xf32>
    %12 = math.exp %11 : vector<152x128xf32>
    %cst_5 = arith.constant 1.000000e+00 : f32
    %13 = vector.broadcast %cst_5 : f32 to vector<152x128xf32>
    %14 = arith.addf %13, %12 : vector<152x128xf32>
    %15 = arith.divf %13, %14 : vector<152x128xf32>
    %16 = arith.mulf %9, %15 : vector<152x128xf32>
    %c0_6 = arith.constant 0 : index
    %c0_7 = arith.constant 0 : index
    %17 = vector.load %arg4[%c0_6, %c0_7] : memref<128x128xf32, #tpu.memory_space<vmem>>, vector<128x128xf32>
    %18 = arith.truncf %16 : vector<152x128xf32> to vector<152x128xbf16>
    %19 = arith.truncf %17 : vector<128x128xf32> to vector<128x128xbf16>
    %cst_8 = arith.constant dense<0.000000e+00> : vector<152x128xf32>
    %20 = tpu.matmul %18, %19, %cst_8 {dimension_numbers = #tpu.dot_dimension_numbers<[1], [0], [0], [1], [0, 0, 1, 1], [], []>} : vector<152x128xbf16>, vector<128x128xbf16>, vector<152x128xf32> -> vector<152x128xf32>
    %c0_9 = arith.constant 0 : index
    %c0_10 = arith.constant 0 : index
    %21 = vector.load %arg5[%c0_9, %c0_10] : memref<1x128xf32, #tpu.memory_space<vmem>>, vector<1x128xf32>
    %22 = vector.broadcast %21 : vector<1x128xf32> to vector<152x128xf32>
    %23 = arith.addf %20, %22 : vector<152x128xf32>
    %c0_11 = arith.constant 0 : index
    %c0_12 = arith.constant 0 : index
    %24 = vector.load %arg6[%c0_11, %c0_12] : memref<152x128xf32, #tpu.memory_space<vmem>>, vector<152x128xf32>
    tpu.vector_store %arg6[%c0_11, %c0_12], %23 {strides = array<i32>} : memref<152x128xf32, #tpu.memory_space<vmem>>, vector<152x128xf32>,
    return
  }
  func.func @transform_0(%arg0: i32) -> (i32, i32) {
    %c0_i32 = arith.constant 0 : i32
    %c0_i32_0 = arith.constant 0 : i32
    return %arg0, %c0_i32 : i32, i32
  }
  func.func @transform_1(%arg0: i32) -> (i32, i32) {
    %c0_i32 = arith.constant 0 : i32
    %c0_i32_0 = arith.constant 0 : i32
    %c0_i32_1 = arith.constant 0 : i32
    return %c0_i32, %c0_i32_0 : i32, i32
  }
  func.func @transform_2(%arg0: i32) -> (i32, i32) {
    %c0_i32 = arith.constant 0 : i32
    %c0_i32_0 = arith.constant 0 : i32
    %c0_i32_1 = arith.constant 0 : i32
    return %c0_i32, %c0_i32_0 : i32, i32
  }
  func.func @transform_3(%arg0: i32) -> (i32, i32) {
    %c0_i32 = arith.constant 0 : i32
    %c0_i32_0 = arith.constant 0 : i32
    %c0_i32_1 = arith.constant 0 : i32
    return %c0_i32, %c0_i32_0 : i32, i32
  }
  func.func @transform_4(%arg0: i32) -> (i32, i32) {
    %c0_i32 = arith.constant 0 : i32
    %c0_i32_0 = arith.constant 0 : i32
    %c0_i32_1 = arith.constant 0 : i32
    return %c0_i32, %c0_i32_0 : i32, i32
  }
  func.func @transform_5(%arg0: i32) -> (i32, i32) {
    %c0_i32 = arith.constant 0 : i32
    %c0_i32_0 = arith.constant 0 : i32
    return %arg0, %c0_i32 : i32, i32
  }
}

</mosaic_0001>

<llo_original>
// kernel: tpu_custom_call.1
$region0: #{tpu_custom_call.1}
  #allocation0 [shape = 'u32[]', space=smem, size = 0x4, offset = 0x4, fixed_abs, tag = 'smem constant byte address 0x4 - core index']
  #allocation1 [shape = 'u32[72,128]{1,0:T(1,128)}', space=vmem, size = 0x9000, scoped, tag = 'internal scratch']
  %s0 = inlined_call_operand.hbm [shape: f32[300,256], index: 0, kind: input, shape index: {}]
  %s1 = inlined_call_operand.hbm [shape: f32[256,256], index: 1, kind: input, shape index: {}]
  %s2 = inlined_call_operand.hbm [shape: f32[1,256], index: 2, kind: input, shape index: {}]
  %s3 = inlined_call_operand.hbm [shape: f32[128,128], index: 3, kind: input, shape index: {}]
  %s4 = inlined_call_operand.vmem [shape: f32[1,128], index: 4, kind: input, shape index: {}]
  %s5 = inlined_call_operand.hbm [shape: f32[300,128], index: 5, kind: output, shape index: {}]
  %s6 = sld [smem:[#allocation0]]
  $region69: #{tpu_custom_call.1} parent=0
    _
  %s8 = ssub.s32 1, %s6
  %s9 = scalar_select 0, %s8, %s6
  $region1: #{tpu_custom_call.1} parent=0
    #allocation2 [shape = 'u8[311296]{0}', space=vmem, size = 0x4c000, scoped, tag = 'input window, operand 0']
    #allocation3 [shape = 's32[2]{0}', space=sflag, size = 0x8, scoped, tag = 'scoped memory for tpu_custom_call.1']
    #allocation4 [shape = 's32[2]{0}', space=sflag, size = 0x8, scoped, tag = 'scoped memory for tpu_custom_call.1']
    #allocation5 [shape = 'u8[262144]{0}', space=vmem, size = 0x40000, scoped, tag = 'input window, operand 1, single buffered']
    #allocation6 [shape = 's32[1]{0}', space=sflag, size = 0x4, scoped, tag = 'scoped memory for tpu_custom_call.1']
    #allocation7 [shape = 'u8[1024]{0}', space=vmem, size = 0x400, scoped, tag = 'input window, operand 2, single buffered']
    #allocation8 [shape = 'u8[65536]{0}', space=vmem, size = 0x10000, scoped, tag = 'input window, operand 3, single buffered']
    #allocation9 [shape = 's32[1]{0}', space=sflag, size = 0x4, scoped, tag = 'scoped memory for tpu_custom_call.1']
    #allocation10 [shape = 'u8[155648]{0}', space=vmem, size = 0x26000, scoped, tag = 'output window, operand 0']
    %10 = vsyncpa [#allocation3], 0
    %s11 = scalar_lea.sflag [#allocation3], 1
    %12 = vsyncpa %s11, 0
    %13 = vsyncpa [#allocation6], 0
    %14 = vsyncpa [#allocation9], 0
    %15 = vsyncpa [#allocation4], 0
    %s16 = scalar_lea.sflag [#allocation4], 1
    %17 = vsyncpa %s16, 0
    loop: start=0, step=1, limit=4
    $region2: #{tpu_custom_call.1} parent=1 // loop_pre_header
      _
    $region3: #{tpu_custom_call.1} parent=1 // loop_header
      %s19 = sphi 0, %s23
      %p20 = scmp.ge.s32.totalorder %s19, 4
      %s29 = sphi 0, %s31
      %s32 = sphi 0, %s29
      %s33 = sphi 0, %s32
      %s49 = sphi 0, %s33
      %s53 = sphi 0, %s53
      %s55 = sphi 0, %s53
      %s56 = sphi 0, %s55
      %s70 = sphi 0, %s56
      %s74 = sphi 0, %s74
      %s76 = sphi 0, %s74
      %s77 = sphi 0, %s76
      %s91 = sphi 0, %s77
      %s95 = sphi 0, %s95
      %s97 = sphi 0, %s95
      %s98 = sphi 0, %s97
      %s112 = sphi 0, %s98
      %s116 = sphi 0, %s116
      %s118 = sphi 0, %s116
      %s119 = sphi 0, %s118
      %s133 = sphi 0, %s119
      %s139 = sphi 0, %s141
      %s142 = sphi 0, %s139
      %s143 = sphi 0, %s142
      %s159 = sphi 0, %s143
    $region4: #{tpu_custom_call.1} parent=1 // loop_header_branch
      %22 = sbr.rel (%p20) target = $region8
    $region5: #{tpu_custom_call.1} parent=1 // loop_body
      %s24 = ssub.s32 %s19, 1
      %s25 = ssub.s32 %s19, 2
      %s26 = sadd.s32 %s19, 1
      %s27 = ssub.s32 %s19, %s26
      %p28 = scmp.eq.s32.totalorder %s27, 0
      %s30 = sadd.s32 %s29, 1
      %s31 = scalar_select %p28, %s29, %s30
      %p34 = pneg %p28
      %p35 = scmp.eq.s32.totalorder %s19, 1
      %p36 = por %p34, %p35
      %p37 = scmp.ne.s32.totalorder %s29, %s32
      %p38 = scmp.eq.s32.totalorder %s19, 0
      %p39 = por %p37, %p38
      %p40 = scmp.ne.s32.totalorder %s29, %s32
      %p41 = scmp.eq.s32.totalorder %s24, 1
      %p42 = por %p40, %p41
      %p43 = scmp.ne.s32.totalorder %s32, %s33
      %p44 = scmp.eq.s32.totalorder %s24, 0
      %p45 = por %p43, %p44
      %p46 = scmp.ne.s32.totalorder %s32, %s33
      %p47 = scmp.eq.s32.totalorder %s25, 1
      %p48 = por %p46, %p47
      %p50 = scmp.ne.s32.totalorder %s33, %s49
      %p51 = scmp.eq.s32.totalorder %s25, 0
      %p52 = por %p50, %p51
      %s54 = sadd.s32 %s53, 1
      %p57 = scmp.eq.s32.totalorder %s19, 1
      %p58 = scmp.ne.s32.totalorder %s53, %s55
      %p59 = scmp.eq.s32.totalorder %s19, 0
      %p60 = por %p58, %p59
      %p61 = scmp.ne.s32.totalorder %s53, %s55
      %p62 = scmp.eq.s32.totalorder %s24, 1
      %p63 = por %p61, %p62
      %p64 = scmp.ne.s32.totalorder %s55, %s56
      %p65 = scmp.eq.s32.totalorder %s24, 0
      %p66 = por %p64, %p65
      %p67 = scmp.ne.s32.totalorder %s55, %s56
      %p68 = scmp.eq.s32.totalorder %s25, 1
      %p69 = por %p67, %p68
      %p71 = scmp.ne.s32.totalorder %s56, %s70
      %p72 = scmp.eq.s32.totalorder %s25, 0
      %p73 = por %p71, %p72
      %s75 = sadd.s32 %s74, 1
      %p78 = scmp.eq.s32.totalorder %s19, 1
      %p79 = scmp.ne.s32.totalorder %s74, %s76
      %p80 = scmp.eq.s32.totalorder %s19, 0
      %p81 = por %p79, %p80
      %p82 = scmp.ne.s32.totalorder %s74, %s76
      %p83 = scmp.eq.s32.totalorder %s24, 1
      %p84 = por %p82, %p83
      %p85 = scmp.ne.s32.totalorder %s76, %s77
      %p86 = scmp.eq.s32.totalorder %s24, 0
      %p87 = por %p85, %p86
      %p88 = scmp.ne.s32.totalorder %s76, %s77
      %p89 = scmp.eq.s32.totalorder %s25, 1
      %p90 = por %p88, %p89
      %p92 = scmp.ne.s32.totalorder %s77, %s91
      %p93 = scmp.eq.s32.totalorder %s25, 0
      %p94 = por %p92, %p93
      %s96 = sadd.s32 %s95, 1
      %p99 = scmp.eq.s32.totalorder %s19, 1
      %p100 = scmp.ne.s32.totalorder %s95, %s97
      %p101 = scmp.eq.s32.totalorder %s19, 0
      %p102 = por %p100, %p101
      %p103 = scmp.ne.s32.totalorder %s95, %s97
      %p104 = scmp.eq.s32.totalorder %s24, 1
      %p105 = por %p103, %p104
      %p106 = scmp.ne.s32.totalorder %s97, %s98
      %p107 = scmp.eq.s32.totalorder %s24, 0
      %p108 = por %p106, %p107
      %p109 = scmp.ne.s32.totalorder %s97, %s98
      %p110 = scmp.eq.s32.totalorder %s25, 1
      %p111 = por %p109, %p110
      %p113 = scmp.ne.s32.totalorder %s98, %s112
      %p114 = scmp.eq.s32.totalorder %s25, 0
      %p115 = por %p113, %p114
      %s117 = sadd.s32 %s116, 1
      %p120 = scmp.eq.s32.totalorder %s19, 1
      %p121 = scmp.ne.s32.totalorder %s116, %s118
      %p122 = scmp.eq.s32.totalorder %s19, 0
      %p123 = por %p121, %p122
      %p124 = scmp.ne.s32.totalorder %s116, %s118
      %p125 = scmp.eq.s32.totalorder %s24, 1
      %p126 = por %p124, %p125
      %p127 = scmp.ne.s32.totalorder %s118, %s119
      %p128 = scmp.eq.s32.totalorder %s24, 0
      %p129 = por %p127, %p128
      %p130 = scmp.ne.s32.totalorder %s118, %s119
      %p131 = scmp.eq.s32.totalorder %s25, 1
      %p132 = por %p130, %p131
      %p134 = scmp.ne.s32.totalorder %s119, %s133
      %p135 = scmp.eq.s32.totalorder %s25, 0
      %p136 = por %p134, %p135
      %s137 = ssub.s32 %s19, %s26
      %p138 = scmp.eq.s32.totalorder %s137, 0
      %s140 = sadd.s32 %s139, 1
      %s141 = scalar_select %p138, %s139, %s140
      %p144 = pneg %p138
      %p145 = scmp.eq.s32.totalorder %s19, 1
      %p146 = por %p144, %p145
      %p147 = scmp.ne.s32.totalorder %s139, %s142
      %p148 = scmp.eq.s32.totalorder %s19, 0
      %p149 = por %p147, %p148
      %p150 = scmp.ne.s32.totalorder %s139, %s142
      %p151 = scmp.eq.s32.totalorder %s24, 1
      %p152 = por %p150, %p151
      %p153 = scmp.ne.s32.totalorder %s142, %s143
      %p154 = scmp.eq.s32.totalorder %s24, 0
      %p155 = por %p153, %p154
      %p156 = scmp.ne.s32.totalorder %s142, %s143
      %p157 = scmp.eq.s32.totalorder %s25, 1
      %p158 = por %p156, %p157
      %p160 = scmp.ne.s32.totalorder %s143, %s159
      %p161 = scmp.eq.s32.totalorder %s25, 0
      %p162 = por %p160, %p161
      %p163 = scmp.le.s32.totalorder 1, %s19
      %p164 = scmp.lt.s32.totalorder %s19, 3
      %p165 = pnand %p163, %p164
      %p166 = pneg %p165
      // Predicated region
      $region9: #{tpu_custom_call.1} parent=5 // pred_check
        _
      $region10: #{tpu_custom_call.1} parent=5 // pred_check_branch
        %168 = sbr.rel (%p165) target = $region12
      $region11: #{tpu_custom_call.1} parent=5 // pred_region
        %s169 = ssub.s32 %s19, 1
        // Predicated region
        $region13: #{tpu_custom_call.1} parent=11 // pred_check
          %p170 = pneg %p66
        $region14: #{tpu_custom_call.1} parent=11 // pred_check_branch
          %172 = sbr.rel (%p170) target = $region16
        $region15: #{tpu_custom_call.1} parent=11 // pred_region
          %174 = vsyncadd [#allocation6], 0
          %s175 = sshll.u32 %s1, 4
          %s176 = int_to_ptr.hbm [resolvable:$true] %s175
          %s177 = sshll.u32 [#allocation5], 4
          %s178 = int_to_ptr.vmem [resolvable:$true] %s177
          %183 = dma.hbm_to_vmem [thread:$0]  %s176, 8192, %s178, [#allocation6], 256, 256, 16
        $region16: #{tpu_custom_call.1} parent=11 // pred_fallthru
          _
        // Predicated region
        $region17: #{tpu_custom_call.1} parent=11 // pred_check
          %p184 = pneg %p87
        $region18: #{tpu_custom_call.1} parent=11 // pred_check_branch
          %186 = sbr.rel (%p184) target = $region20
        $region19: #{tpu_custom_call.1} parent=11 // pred_region
          %188 = vsyncadd [#allocation6], 0
          %s190 = sshll.u32 %s2, 4
          %s191 = int_to_ptr.hbm [resolvable:$true] %s190
          %s192 = sshll.u32 [#allocation7], 4
          %s193 = int_to_ptr.vmem [resolvable:$true] %s192
          %195 = dma.hbm_to_vmem [thread:$0]  %s191, 32, %s193, [#allocation6]
        $region20: #{tpu_custom_call.1} parent=11 // pred_fallthru
          _
        // Predicated region
        $region21: #{tpu_custom_call.1} parent=11 // pred_check
          %p196 = pneg %p108
        $region22: #{tpu_custom_call.1} parent=11 // pred_check_branch
          %198 = sbr.rel (%p196) target = $region24
        $region23: #{tpu_custom_call.1} parent=11 // pred_region
          %200 = vsyncadd [#allocation9], 0
          %s201 = sshll.u32 %s3, 4
          %s202 = int_to_ptr.hbm [resolvable:$true] %s201
          %s203 = sshll.u32 [#allocation8], 4
          %s204 = int_to_ptr.vmem [resolvable:$true] %s203
          %209 = dma.hbm_to_vmem [thread:$0]  %s202, 2048, %s204, [#allocation9], 128, 128, 8
        $region24: #{tpu_custom_call.1} parent=11 // pred_fallthru
          _
        // Predicated region
        $region25: #{tpu_custom_call.1} parent=11 // pred_check
          %p210 = pneg %p129
        $region26: #{tpu_custom_call.1} parent=11 // pred_check_branch
          %212 = sbr.rel (%p210) target = $region28
        $region27: #{tpu_custom_call.1} parent=11 // pred_region
          _
        $region28: #{tpu_custom_call.1} parent=11 // pred_fallthru
          _
      $region12: #{tpu_custom_call.1} parent=5 // pred_fallthru
        _
      %p213 = scmp.lt.s32.totalorder %s19, 2
      // Predicated region
      $region29: #{tpu_custom_call.1} parent=5 // pred_check
        %p214 = pneg %p213
      $region30: #{tpu_custom_call.1} parent=5 // pred_check_branch
        %216 = sbr.rel (%p214) target = $region32
      $region31: #{tpu_custom_call.1} parent=5 // pred_region
        // Predicated region
        $region33: #{tpu_custom_call.1} parent=31 // pred_check
          %p217 = pneg %p39
        $region34: #{tpu_custom_call.1} parent=31 // pred_check_branch
          %219 = sbr.rel (%p217) target = $region36
        $region35: #{tpu_custom_call.1} parent=31 // pred_region
          %s220 = sand.u32 %s29, 1
          %s221 = scalar_lea.sflag [#allocation3], %s220
          %s222 = sand.u32 %s29, 1
          %s223 = smul.addr %s222, 304
          %s224 = scalar_lea.vmem [#allocation2], %s223
          %s225 = smul.u32 19, %s19
          %227 = vsyncadd %s221, 0
          %s228 = smul.addr %s225, 2
          %s229 = smul.addr %s228, 8
          %s230 = scalar_lea.hbm %s0, %s229
          %s231 = sshll.u32 %s230, 4
          %s232 = int_to_ptr.hbm [resolvable:$true] %s231
          %s233 = sshll.u32 %s224, 4
          %s234 = int_to_ptr.vmem [resolvable:$true] %s233
          %239 = dma.hbm_to_vmem [thread:$0]  %s232, 4864, %s234, %s221, 256, 256, 16
        $region36: #{tpu_custom_call.1} parent=31 // pred_fallthru
          _
      $region32: #{tpu_custom_call.1} parent=5 // pred_fallthru
        _
      %p240 = scmp.le.s32.totalorder 1, %s19
      %p241 = scmp.lt.s32.totalorder %s19, 3
      %p242 = pnand %p240, %p241
      %p243 = pneg %p242
      // Predicated region
      $region37: #{tpu_custom_call.1} parent=5 // pred_check
        _
      $region38: #{tpu_custom_call.1} parent=5 // pred_check_branch
        %245 = sbr.rel (%p242) target = $region40
      $region39: #{tpu_custom_call.1} parent=5 // pred_region
        %s246 = ssub.s32 %s19, 1
        %s247 = sand.u32 %s32, 1
        %s248 = scalar_lea.sflag [#allocation3], %s247
        %s249 = sand.u32 %s32, 1
        %s250 = smul.addr %s249, 304
        %s251 = scalar_lea.vmem [#allocation2], %s250
        // Predicated region
        $region41: #{tpu_custom_call.1} parent=39 // pred_check
          %p252 = pneg %p45
        $region42: #{tpu_custom_call.1} parent=39 // pred_check_branch
          %254 = sbr.rel (%p252) target = $region44
        $region43: #{tpu_custom_call.1} parent=39 // pred_region
          %256 = dma.done %s248, 4864
        $region44: #{tpu_custom_call.1} parent=39 // pred_fallthru
          _
        // Predicated region
        $region45: #{tpu_custom_call.1} parent=39 // pred_check
          %p257 = pneg %p66
        $region46: #{tpu_custom_call.1} parent=39 // pred_check_branch
          %259 = sbr.rel (%p257) target = $region48
        $region47: #{tpu_custom_call.1} parent=39 // pred_region
          %261 = dma.done [#allocation6], 8192
        $region48: #{tpu_custom_call.1} parent=39 // pred_fallthru
          _
        // Predicated region
        $region49: #{tpu_custom_call.1} parent=39 // pred_check
          %p262 = pneg %p87
        $region50: #{tpu_custom_call.1} parent=39 // pred_check_branch
          %264 = sbr.rel (%p262) target = $region52
        $region51: #{tpu_custom_call.1} parent=39 // pred_region
          %266 = dma.done [#allocation6], 32
        $region52: #{tpu_custom_call.1} parent=39 // pred_fallthru
          _
        // Predicated region
        $region53: #{tpu_custom_call.1} parent=39 // pred_check
          %p267 = pneg %p108
        $region54: #{tpu_custom_call.1} parent=39 // pred_check_branch
          %269 = sbr.rel (%p267) target = $region56
        $region55: #{tpu_custom_call.1} parent=39 // pred_region
          %271 = dma.done [#allocation9], 2048
        $region56: #{tpu_custom_call.1} parent=39 // pred_fallthru
          _
        %s272 = sand.u32 %s32, 1
        %s273 = scalar_lea.sflag [#allocation3], %s272
        %s274 = sand.u32 %s32, 1
        %s275 = smul.addr %s274, 304
        %s276 = scalar_lea.vmem [#allocation2], %s275
        %p277 = pneg %p45
        %p278 = pneg %p42
        %p279 = pneg %p66
        %p280 = pneg %p63
        %p281 = pneg %p87
        %p282 = pneg %p84
        %p283 = pneg %p108
        %p284 = pneg %p105
        %p285 = pneg %p129
        %p286 = pneg %p126
        %p287 = pneg %p155
        %p288 = pneg %p152
        %s289 = sand.u32 %s142, 1
        %s290 = scalar_lea.sflag [#allocation4], %s289
        %s291 = sand.u32 %s142, 1
        %s292 = smul.addr %s291, 152
        %s293 = scalar_lea.vmem [#allocation10], %s292
        %s294 = smul.u32 19, %s24
        %s295 = smul.u32 19, %s24
        %v296 = vld [vmem:[%s251] sm:$0xff]
        %v297 = vld [vmem:[%s251 + $0x8] sm:$0xff]
        %v298 = vld [vmem:[%s251 + $0x10] sm:$0xff]
        %v299 = vld [vmem:[%s251 + $0x18] sm:$0xff]
        %v300 = vld [vmem:[%s251 + $0x20] sm:$0xff]
        %v301 = vld [vmem:[%s251 + $0x28] sm:$0xff]
        %v302 = vld [vmem:[%s251 + $0x30] sm:$0xff]
        %v303 = vld [vmem:[%s251 + $0x38] sm:$0xff]
        %v304 = vld [vmem:[%s251 + $0x40] sm:$0xff]
        %v305 = vld [vmem:[%s251 + $0x48] sm:$0xff]
        %v306 = vld [vmem:[%s251 + $0x50] sm:$0xff]
        %v307 = vld [vmem:[%s251 + $0x58] sm:$0xff]
        %v308 = vld [vmem:[%s251 + $0x60] sm:$0xff]
        %v309 = vld [vmem:[%s251 + $0x68] sm:$0xff]
        %v310 = vld [vmem:[%s251 + $0x70] sm:$0xff]
        %v311 = vld [vmem:[%s251 + $0x78] sm:$0xff]
        %v312 = vld [vmem:[%s251 + $0x80] sm:$0xff]
        %v313 = vld [vmem:[%s251 + $0x88] sm:$0xff]
        %v314 = vld [vmem:[%s251 + $0x90] sm:$0xff]
        %v315 = vld [vmem:[%s251 + $0x98] sm:$0xff]
        %v316 = vld [vmem:[%s251 + $0xa0] sm:$0xff]
        %v317 = vld [vmem:[%s251 + $0xa8] sm:$0xff]
        %v318 = vld [vmem:[%s251 + $0xb0] sm:$0xff]
        %v319 = vld [vmem:[%s251 + $0xb8] sm:$0xff]
        %v320 = vld [vmem:[%s251 + $0xc0] sm:$0xff]
        %v321 = vld [vmem:[%s251 + $0xc8] sm:$0xff]
        %v322 = vld [vmem:[%s251 + $0xd0] sm:$0xff]
        %v323 = vld [vmem:[%s251 + $0xd8] sm:$0xff]
        %v324 = vld [vmem:[%s251 + $0xe0] sm:$0xff]
        %v325 = vld [vmem:[%s251 + $0xe8] sm:$0xff]
        %v326 = vld [vmem:[%s251 + $0xf0] sm:$0xff]
        %v327 = vld [vmem:[%s251 + $0xf8] sm:$0xff]
        %v328 = vld [vmem:[%s251 + $0x100] sm:$0xff]
        %v329 = vld [vmem:[%s251 + $0x108] sm:$0xff]
        %v330 = vld [vmem:[%s251 + $0x110] sm:$0xff]
        %v331 = vld [vmem:[%s251 + $0x118] sm:$0xff]
        %v332 = vld [vmem:[%s251 + $0x120] sm:$0xff]
        %v333 = vld [vmem:[%s251 + $0x128] sm:$0xff]
        %v334 = vld [vmem:[#allocation5] sm:$0xff]
        %v335 = vld [vmem:[#allocation5 + $0x8] sm:$0xff]
        %v336 = vld [vmem:[#allocation5 + $0x10] sm:$0xff]
        %v337 = vld [vmem:[#allocation5 + $0x18] sm:$0xff]
        %v338 = vld [vmem:[#allocation5 + $0x20] sm:$0xff]
        %v339 = vld [vmem:[#allocation5 + $0x28] sm:$0xff]
        %v340 = vld [vmem:[#allocation5 + $0x30] sm:$0xff]
        %v341 = vld [vmem:[#allocation5 + $0x38] sm:$0xff]
        %v342 = vld [vmem:[#allocation5 + $0x40] sm:$0xff]
        %v343 = vld [vmem:[#allocation5 + $0x48] sm:$0xff]
        %v344 = vld [vmem:[#allocation5 + $0x50] sm:$0xff]
        %v345 = vld [vmem:[#allocation5 + $0x58] sm:$0xff]
        %v346 = vld [vmem:[#allocation5 + $0x60] sm:$0xff]
        %v347 = vld [vmem:[#allocation5 + $0x68] sm:$0xff]
        %v348 = vld [vmem:[#allocation5 + $0x70] sm:$0xff]
        %v349 = vld [vmem:[#allocation5 + $0x78] sm:$0xff]
        %v350 = vld [vmem:[#allocation5 + $0x80] sm:$0xff]
        %v351 = vld [vmem:[#allocation5 + $0x88] sm:$0xff]
        %v352 = vld [vmem:[#allocation5 + $0x90] sm:$0xff]
        %v353 = vld [vmem:[#allocation5 + $0x98] sm:$0xff]
        %v354 = vld [vmem:[#allocation5 + $0xa0] sm:$0xff]
        %v355 = vld [vmem:[#allocation5 + $0xa8] sm:$0xff]
        %v356 = vld [vmem:[#allocation5 + $0xb0] sm:$0xff]
        %v357 = vld [vmem:[#allocation5 + $0xb8] sm:$0xff]
        %v358 = vld [vmem:[#allocation5 + $0xc0] sm:$0xff]
        %v359 = vld [vmem:[#allocation5 + $0xc8] sm:$0xff]
        %v360 = vld [vmem:[#allocation5 + $0xd0] sm:$0xff]
        %v361 = vld [vmem:[#allocation5 + $0xd8] sm:$0xff]
        %v362 = vld [vmem:[#allocation5 + $0xe0] sm:$0xff]
        %v363 = vld [vmem:[#allocation5 + $0xe8] sm:$0xff]
        %v364 = vld [vmem:[#allocation5 + $0xf0] sm:$0xff]
        %v365 = vld [vmem:[#allocation5 + $0xf8] sm:$0xff]
        %v366 = vld [vmem:[#allocation5 + $0x100] sm:$0xff]
        %v367 = vld [vmem:[#allocation5 + $0x108] sm:$0xff]
        %v368 = vld [vmem:[#allocation5 + $0x110] sm:$0xff]
        %v369 = vld [vmem:[#allocation5 + $0x118] sm:$0xff]
        %v370 = vld [vmem:[#allocation5 + $0x120] sm:$0xff]
        %v371 = vld [vmem:[#allocation5 + $0x128] sm:$0xff]
        %v372 = vld [vmem:[#allocation5 + $0x130] sm:$0xff]
        %v373 = vld [vmem:[#allocation5 + $0x138] sm:$0xff]
        %v374 = vld [vmem:[#allocation5 + $0x140] sm:$0xff]
        %v375 = vld [vmem:[#allocation5 + $0x148] sm:$0xff]
        %v376 = vld [vmem:[#allocation5 + $0x150] sm:$0xff]
        %v377 = vld [vmem:[#allocation5 + $0x158] sm:$0xff]
        %v378 = vld [vmem:[#allocation5 + $0x160] sm:$0xff]
        %v379 = vld [vmem:[#allocation5 + $0x168] sm:$0xff]
        %v380 = vld [vmem:[#allocation5 + $0x170] sm:$0xff]
        %v381 = vld [vmem:[#allocation5 + $0x178] sm:$0xff]
        %v382 = vld [vmem:[#allocation5 + $0x180] sm:$0xff]
        %v383 = vld [vmem:[#allocation5 + $0x188] sm:$0xff]
        %v384 = vld [vmem:[#allocation5 + $0x190] sm:$0xff]
        %v385 = vld [vmem:[#allocation5 + $0x198] sm:$0xff]
        %v386 = vld [vmem:[#allocation5 + $0x1a0] sm:$0xff]
        %v387 = vld [vmem:[#allocation5 + $0x1a8] sm:$0xff]
        %v388 = vld [vmem:[#allocation5 + $0x1b0] sm:$0xff]
        %v389 = vld [vmem:[#allocation5 + $0x1b8] sm:$0xff]
        %v390 = vld [vmem:[#allocation5 + $0x1c0] sm:$0xff]
        %v391 = vld [vmem:[#allocation5 + $0x1c8] sm:$0xff]
        %v392 = vld [vmem:[#allocation5 + $0x1d0] sm:$0xff]
        %v393 = vld [vmem:[#allocation5 + $0x1d8] sm:$0xff]
        %v394 = vld [vmem:[#allocation5 + $0x1e0] sm:$0xff]
        %v395 = vld [vmem:[#allocation5 + $0x1e8] sm:$0xff]
        %v396 = vld [vmem:[#allocation5 + $0x1f0] sm:$0xff]
        %v397 = vld [vmem:[#allocation5 + $0x1f8] sm:$0xff]
        %v398 = vpack.c.bf16 %v298, %v296
        %v399 = vpack.c.bf16 %v299, %v297
        %v400 = vpack.c.bf16 %v302, %v300
        %v401 = vpack.c.bf16 %v303, %v301
        %v402 = vpack.c.bf16 %v306, %v304
        %v403 = vpack.c.bf16 %v307, %v305
        %v404 = vpack.c.bf16 %v310, %v308
        %v405 = vpack.c.bf16 %v311, %v309
        %v406 = vpack.c.bf16 %v314, %v312
        %v407 = vpack.c.bf16 %v315, %v313
        %v408 = vpack.c.bf16 %v318, %v316
        %v409 = vpack.c.bf16 %v319, %v317
        %v410 = vpack.c.bf16 %v322, %v320
        %v411 = vpack.c.bf16 %v323, %v321
        %v412 = vpack.c.bf16 %v326, %v324
        %v413 = vpack.c.bf16 %v327, %v325
        %v414 = vpack.c.bf16 %v330, %v328
        %v415 = vpack.c.bf16 %v331, %v329
        %v416 = vpack.c.bf16 %v332, %v332
        %v417 = vpack.c.bf16 %v333, %v333
        %v418 = vpack.c.bf16 %v336, %v334
        %v419 = vpack.c.bf16 %v337, %v335
        %v420 = vpack.c.bf16 %v340, %v338
        %v421 = vpack.c.bf16 %v341, %v339
        %v422 = vpack.c.bf16 %v344, %v342
        %v423 = vpack.c.bf16 %v345, %v343
        %v424 = vpack.c.bf16 %v348, %v346
        %v425 = vpack.c.bf16 %v349, %v347
        %v426 = vpack.c.bf16 %v352, %v350
        %v427 = vpack.c.bf16 %v353, %v351
        %v428 = vpack.c.bf16 %v356, %v354
        %v429 = vpack.c.bf16 %v357, %v355
        %v430 = vpack.c.bf16 %v360, %v358
        %v431 = vpack.c.bf16 %v361, %v359
        %v432 = vpack.c.bf16 %v364, %v362
        %v433 = vpack.c.bf16 %v365, %v363
        %v434 = vpack.c.bf16 %v368, %v366
        %v435 = vpack.c.bf16 %v369, %v367
        %v436 = vpack.c.bf16 %v372, %v370
        %v437 = vpack.c.bf16 %v373, %v371
        %v438 = vpack.c.bf16 %v376, %v374
        %v439 = vpack.c.bf16 %v377, %v375
        %v440 = vpack.c.bf16 %v380, %v378
        %v441 = vpack.c.bf16 %v381, %v379
        %v442 = vpack.c.bf16 %v384, %v382
        %v443 = vpack.c.bf16 %v385, %v383
        %v444 = vpack.c.bf16 %v388, %v386
        %v445 = vpack.c.bf16 %v389, %v387
        %v446 = vpack.c.bf16 %v392, %v390
        %v447 = vpack.c.bf16 %v393, %v391
        %v448 = vpack.c.bf16 %v396, %v394
        %v449 = vpack.c.bf16 %v397, %v395
        %v450 = vld [vmem:[#allocation7] sm:$0x3]
        %v452 = vperm.slane %v450, 0
        %v453 = vperm.slane %v450, 1
        %456 = vmatpush.bf16.msra.mxu0 %v432
        %457 = vmatpush.bf16.msra.mxu0 %v430
        %458 = vmatpush.bf16.msra.mxu0 %v428
        %459 = vmatpush.bf16.msra.mxu0 %v426
        %460 = vmatpush.bf16.msra.mxu0 %v424
        %461 = vmatpush.bf16.msra.mxu0 %v422
        %462 = vmatpush.bf16.msra.mxu0 %v420
        %463 = vmatpush.bf16.msra.mxu0 %v418
        %464 = vmatmul.bf16.gmra.mxu0 %v398
        %v465 = vpop.f32.mrf.mxu0
        %v466 = vadd.f32 %v452, %v465
        %v467 = vpop.f32.mrf.mxu0
        %v468 = vadd.f32 %v452, %v467
        %469 = vmatmul.bf16.gmra.mxu0 %v400
        %v470 = vpop.f32.mrf.mxu0
        %v471 = vadd.f32 %v452, %v470
        %v472 = vpop.f32.mrf.mxu0
        %v473 = vadd.f32 %v452, %v472
        %474 = vmatmul.bf16.gmra.mxu0 %v402
        %v475 = vpop.f32.mrf.mxu0
        %v476 = vadd.f32 %v452, %v475
        %v477 = vpop.f32.mrf.mxu0
        %v478 = vadd.f32 %v452, %v477
        %479 = vmatmul.bf16.gmra.mxu0 %v404
        %v480 = vpop.f32.mrf.mxu0
        %v481 = vadd.f32 %v452, %v480
        %v482 = vpop.f32.mrf.mxu0
        %v483 = vadd.f32 %v452, %v482
        %484 = vmatmul.bf16.gmra.mxu0 %v406
        %v485 = vpop.f32.mrf.mxu0
        %v486 = vadd.f32 %v452, %v485
        %v487 = vpop.f32.mrf.mxu0
        %v488 = vadd.f32 %v452, %v487
        %489 = vmatmul.bf16.gmra.mxu0 %v408
        %v490 = vpop.f32.mrf.mxu0
        %v491 = vadd.f32 %v452, %v490
        %v492 = vpop.f32.mrf.mxu0
        %v493 = vadd.f32 %v452, %v492
        %494 = vmatmul.bf16.gmra.mxu0 %v410
        %v495 = vpop.f32.mrf.mxu0
        %v496 = vadd.f32 %v452, %v495
        %v497 = vpop.f32.mrf.mxu0
        %v498 = vadd.f32 %v452, %v497
        %499 = vmatmul.bf16.gmra.mxu0 %v412
        %v500 = vpop.f32.mrf.mxu0
        %v501 = vadd.f32 %v452, %v500
        %v502 = vpop.f32.mrf.mxu0
        %v503 = vadd.f32 %v452, %v502
        %504 = vmatmul.bf16.gmra.mxu0 %v414
        %v505 = vpop.f32.mrf.mxu0
        %v506 = vadd.f32 %v452, %v505
        %v507 = vpop.f32.mrf.mxu0
        %v508 = vadd.f32 %v452, %v507
        %509 = vmatmul.bf16.gmra.mxu0 %v416
        %v510 = vpop.f32.mrf.mxu0
        %v511 = vadd.f32 %v452, %v510
        %v512 = vpop.f32.mrf.mxu0
        %513 = vdwg.mxu0
        %514 = vmatpush.bf16.msra.mxu0 %v448
        %515 = vmatpush.bf16.msra.mxu0 %v446
        %516 = vmatpush.bf16.msra.mxu0 %v444
        %517 = vmatpush.bf16.msra.mxu0 %v442
        %518 = vmatpush.bf16.msra.mxu0 %v440
        %519 = vmatpush.bf16.msra.mxu0 %v438
        %520 = vmatpush.bf16.msra.mxu0 %v436
        %521 = vmatpush.bf16.msra.mxu0 %v434
        %522 = vmatmul.bf16.gmra.mxu0 %v399
        %v523 = vpop.f32.mrf.mxu0
        %v524 = vadd.f32 %v466, %v523
        %v525 = vpop.f32.mrf.mxu0
        %v526 = vadd.f32 %v468, %v525
        %527 = vmatmul.bf16.gmra.mxu0 %v401
        %v528 = vpop.f32.mrf.mxu0
        %v529 = vadd.f32 %v471, %v528
        %v530 = vpop.f32.mrf.mxu0
        %v531 = vadd.f32 %v473, %v530
        %532 = vmatmul.bf16.gmra.mxu0 %v403
        %v533 = vpop.f32.mrf.mxu0
        %v534 = vadd.f32 %v476, %v533
        %v535 = vpop.f32.mrf.mxu0
        %v536 = vadd.f32 %v478, %v535
        %537 = vmatmul.bf16.gmra.mxu0 %v405
        %v538 = vpop.f32.mrf.mxu0
        %v539 = vadd.f32 %v481, %v538
        %v540 = vpop.f32.mrf.mxu0
        %v541 = vadd.f32 %v483, %v540
        %542 = vmatmul.bf16.gmra.mxu0 %v407
        %v543 = vpop.f32.mrf.mxu0
        %v544 = vadd.f32 %v486, %v543
        %v545 = vpop.f32.mrf.mxu0
        %v546 = vadd.f32 %v488, %v545
        %547 = vmatmul.bf16.gmra.mxu0 %v409
        %v548 = vpop.f32.mrf.mxu0
        %v549 = vadd.f32 %v491, %v548
        %v550 = vpop.f32.mrf.mxu0
        %v551 = vadd.f32 %v493, %v550
        %552 = vmatmul.bf16.gmra.mxu0 %v411
        %v553 = vpop.f32.mrf.mxu0
        %v554 = vadd.f32 %v496, %v553
        %v555 = vpop.f32.mrf.mxu0
        %v556 = vadd.f32 %v498, %v555
        %557 = vmatmul.bf16.gmra.mxu0 %v413
        %v558 = vpop.f32.mrf.mxu0
        %v559 = vadd.f32 %v501, %v558
        %v560 = vpop.f32.mrf.mxu0
        %v561 = vadd.f32 %v503, %v560
        %562 = vmatmul.bf16.gmra.mxu0 %v415
        %v563 = vpop.f32.mrf.mxu0
        %v564 = vadd.f32 %v506, %v563
        %v565 = vpop.f32.mrf.mxu0
        %v566 = vadd.f32 %v508, %v565
        %567 = vmatmul.bf16.gmra.mxu0 %v417
        %v568 = vpop.f32.mrf.mxu0
        %v569 = vadd.f32 %v511, %v568
        %v570 = vpop.f32.mrf.mxu0
        %571 = vdwg.mxu0
        %572 = vmatpush.bf16.msra.mxu0 %v433
        %573 = vmatpush.bf16.msra.mxu0 %v431
        %574 = vmatpush.bf16.msra.mxu0 %v429
        %575 = vmatpush.bf16.msra.mxu0 %v427
        %576 = vmatpush.bf16.msra.mxu0 %v425
        %577 = vmatpush.bf16.msra.mxu0 %v423
        %578 = vmatpush.bf16.msra.mxu0 %v421
        %579 = vmatpush.bf16.msra.mxu0 %v419
        %580 = vmatmul.bf16.gmra.mxu0 %v398
        %v581 = vpop.f32.mrf.mxu0
        %v582 = vadd.f32 %v453, %v581
        %v583 = vpop.f32.mrf.mxu0
        %v584 = vadd.f32 %v453, %v583
        %585 = vmatmul.bf16.gmra.mxu0 %v400
        %v586 = vpop.f32.mrf.mxu0
        %v587 = vadd.f32 %v453, %v586
        %v588 = vpop.f32.mrf.mxu0
        %v589 = vadd.f32 %v453, %v588
        %590 = vmatmul.bf16.gmra.mxu0 %v402
        %v591 = vpop.f32.mrf.mxu0
        %v592 = vadd.f32 %v453, %v591
        %v593 = vpop.f32.mrf.mxu0
        %v594 = vadd.f32 %v453, %v593
        %595 = vmatmul.bf16.gmra.mxu0 %v404
        %v596 = vpop.f32.mrf.mxu0
        %v597 = vadd.f32 %v453, %v596
        %v598 = vpop.f32.mrf.mxu0
        %v599 = vadd.f32 %v453, %v598
        %600 = vmatmul.bf16.gmra.mxu0 %v406
        %v601 = vpop.f32.mrf.mxu0
        %v602 = vadd.f32 %v453, %v601
        %v603 = vpop.f32.mrf.mxu0
        %v604 = vadd.f32 %v453, %v603
        %605 = vmatmul.bf16.gmra.mxu0 %v408
        %v606 = vpop.f32.mrf.mxu0
        %v607 = vadd.f32 %v453, %v606
        %v608 = vpop.f32.mrf.mxu0
        %v609 = vadd.f32 %v453, %v608
        %610 = vmatmul.bf16.gmra.mxu0 %v410
        %v611 = vpop.f32.mrf.mxu0
        %v612 = vadd.f32 %v453, %v611
        %v613 = vpop.f32.mrf.mxu0
        %v614 = vadd.f32 %v453, %v613
        %615 = vmatmul.bf16.gmra.mxu0 %v412
        %v616 = vpop.f32.mrf.mxu0
        %v617 = vadd.f32 %v453, %v616
        %v618 = vpop.f32.mrf.mxu0
        %v619 = vadd.f32 %v453, %v618
        %620 = vmatmul.bf16.gmra.mxu0 %v414
        %v621 = vpop.f32.mrf.mxu0
        %v622 = vadd.f32 %v453, %v621
        %v623 = vpop.f32.mrf.mxu0
        %v624 = vadd.f32 %v453, %v623
        %625 = vmatmul.bf16.gmra.mxu0 %v416
        %v626 = vpop.f32.mrf.mxu0
        %v627 = vadd.f32 %v453, %v626
        %v628 = vpop.f32.mrf.mxu0
        %629 = vdwg.mxu0
        %630 = vmatpush.bf16.msra.mxu0 %v449
        %631 = vmatpush.bf16.msra.mxu0 %v447
        %632 = vmatpush.bf16.msra.mxu0 %v445
        %633 = vmatpush.bf16.msra.mxu0 %v443
        %634 = vmatpush.bf16.msra.mxu0 %v441
        %635 = vmatpush.bf16.msra.mxu0 %v439
        %636 = vmatpush.bf16.msra.mxu0 %v437
        %637 = vmatpush.bf16.msra.mxu0 %v435
        %638 = vmatmul.bf16.gmra.mxu0 %v399
        %v639 = vpop.f32.mrf.mxu0
        %v640 = vadd.f32 %v582, %v639
        %v641 = vpop.f32.mrf.mxu0
        %v642 = vadd.f32 %v584, %v641
        %643 = vmatmul.bf16.gmra.mxu0 %v401
        %v644 = vpop.f32.mrf.mxu0
        %v645 = vadd.f32 %v587, %v644
        %v646 = vpop.f32.mrf.mxu0
        %v647 = vadd.f32 %v589, %v646
        %648 = vmatmul.bf16.gmra.mxu0 %v403
        %v649 = vpop.f32.mrf.mxu0
        %v650 = vadd.f32 %v592, %v649
        %v651 = vpop.f32.mrf.mxu0
        %v652 = vadd.f32 %v594, %v651
        %653 = vmatmul.bf16.gmra.mxu0 %v405
        %v654 = vpop.f32.mrf.mxu0
        %v655 = vadd.f32 %v597, %v654
        %v656 = vpop.f32.mrf.mxu0
        %v657 = vadd.f32 %v599, %v656
        %658 = vmatmul.bf16.gmra.mxu0 %v407
        %v659 = vpop.f32.mrf.mxu0
        %v660 = vadd.f32 %v602, %v659
        %v661 = vpop.f32.mrf.mxu0
        %v662 = vadd.f32 %v604, %v661
        %663 = vmatmul.bf16.gmra.mxu0 %v409
        %v664 = vpop.f32.mrf.mxu0
        %v665 = vadd.f32 %v607, %v664
        %v666 = vpop.f32.mrf.mxu0
        %v667 = vadd.f32 %v609, %v666
        %668 = vmatmul.bf16.gmra.mxu0 %v411
        %v669 = vpop.f32.mrf.mxu0
        %v670 = vadd.f32 %v612, %v669
        %v671 = vpop.f32.mrf.mxu0
        %v672 = vadd.f32 %v614, %v671
        %673 = vmatmul.bf16.gmra.mxu0 %v413
        %v674 = vpop.f32.mrf.mxu0
        %v675 = vadd.f32 %v617, %v674
        %v676 = vpop.f32.mrf.mxu0
        %v677 = vadd.f32 %v619, %v676
        %678 = vmatmul.bf16.gmra.mxu0 %v415
        %v679 = vpop.f32.mrf.mxu0
        %v680 = vadd.f32 %v622, %v679
        %v681 = vpop.f32.mrf.mxu0
        %v682 = vadd.f32 %v624, %v681
        %683 = vmatmul.bf16.gmra.mxu0 %v417
        %v684 = vpop.f32.mrf.mxu0
        %v685 = vadd.f32 %v627, %v684
        %v686 = vpop.f32.mrf.mxu0
        %687 = vdwg.mxu0
        %v688 = vtanh.pop %v524
        %v689 = vtanh.pop %v526
        %v690 = vtanh.pop %v529
        %v691 = vtanh.pop %v531
        %v692 = vtanh.pop %v534
        %v693 = vtanh.pop %v536
        %v694 = vtanh.pop %v539
        %v695 = vtanh.pop %v541
        %v696 = vtanh.pop %v544
        %v697 = vtanh.pop %v546
        %v698 = vtanh.pop %v549
        %v699 = vtanh.pop %v551
        %v700 = vtanh.pop %v554
        %v701 = vtanh.pop %v556
        %v702 = vtanh.pop %v559
        %v703 = vtanh.pop %v561
        %v704 = vtanh.pop %v564
        %v705 = vtanh.pop %v566
        %v706 = vtanh.pop %v569
        %v707 = vxor.u32 %v640, 2147483648
        %v708 = vxor.u32 %v642, 2147483648
        %v709 = vxor.u32 %v645, 2147483648
        %v710 = vxor.u32 %v647, 2147483648
        %v711 = vxor.u32 %v650, 2147483648
        %v712 = vxor.u32 %v652, 2147483648
        %v713 = vxor.u32 %v655, 2147483648
        %v714 = vxor.u32 %v657, 2147483648
        %v715 = vxor.u32 %v660, 2147483648
        %v716 = vxor.u32 %v662, 2147483648
        %v717 = vxor.u32 %v665, 2147483648
        %v718 = vxor.u32 %v667, 2147483648
        %v719 = vxor.u32 %v670, 2147483648
        %v720 = vxor.u32 %v672, 2147483648
        %v721 = vxor.u32 %v675, 2147483648
        %v722 = vxor.u32 %v677, 2147483648
        %v723 = vxor.u32 %v680, 2147483648
        %v724 = vxor.u32 %v682, 2147483648
        %v725 = vxor.u32 %v685, 2147483648
        %v726 = vmul.f32 %v707, 1.442695
        %v727 = vpow.pop %v726
        %v728 = vmul.f32 %v708, 1.442695
        %v729 = vpow.pop %v728
        %v730 = vmul.f32 %v709, 1.442695
        %v731 = vpow.pop %v730
        %v732 = vmul.f32 %v710, 1.442695
        %v733 = vpow.pop %v732
        %v734 = vmul.f32 %v711, 1.442695
        %v735 = vpow.pop %v734
        %v736 = vmul.f32 %v712, 1.442695
        %v737 = vpow.pop %v736
        %v738 = vmul.f32 %v713, 1.442695
        %v739 = vpow.pop %v738
        %v740 = vmul.f32 %v714, 1.442695
        %v741 = vpow.pop %v740
        %v742 = vmul.f32 %v715, 1.442695
        %v743 = vpow.pop %v742
        %v744 = vmul.f32 %v716, 1.442695
        %v745 = vpow.pop %v744
        %v746 = vmul.f32 %v717, 1.442695
        %v747 = vpow.pop %v746
        %v748 = vmul.f32 %v718, 1.442695
        %v749 = vpow.pop %v748
        %v750 = vmul.f32 %v719, 1.442695
        %v751 = vpow.pop %v750
        %v752 = vmul.f32 %v720, 1.442695
        %v753 = vpow.pop %v752
        %v754 = vmul.f32 %v721, 1.442695
        %v755 = vpow.pop %v754
        %v756 = vmul.f32 %v722, 1.442695
        %v757 = vpow.pop %v756
        %v758 = vmul.f32 %v723, 1.442695
        %v759 = vpow.pop %v758
        %v760 = vmul.f32 %v724, 1.442695
        %v761 = vpow.pop %v760
        %v762 = vmul.f32 %v725, 1.442695
        %v763 = vpow.pop %v762
        %v764 = vadd.f32 %v727, 1.0
        %v765 = vadd.f32 %v729, 1.0
        %v766 = vadd.f32 %v731, 1.0
        %v767 = vadd.f32 %v733, 1.0
        %v768 = vadd.f32 %v735, 1.0
        %v769 = vadd.f32 %v737, 1.0
        %v770 = vadd.f32 %v739, 1.0
        %v771 = vadd.f32 %v741, 1.0
        %v772 = vadd.f32 %v743, 1.0
        %v773 = vadd.f32 %v745, 1.0
        %v774 = vadd.f32 %v747, 1.0
        %v775 = vadd.f32 %v749, 1.0
        %v776 = vadd.f32 %v751, 1.0
        %v777 = vadd.f32 %v753, 1.0
        %v778 = vadd.f32 %v755, 1.0
        %v779 = vadd.f32 %v757, 1.0
        %v780 = vadd.f32 %v759, 1.0
        %v781 = vadd.f32 %v761, 1.0
        %v782 = vadd.f32 %v763, 1.0
        %v783 = vrcp.pop %v764
        %v784 = vmul.f32 %v764, %v783
        %v785 = vsub.f32 1.0, %v784
        %v786 = vmul.f32 %v783, %v785
        %v787 = vadd.f32 %v783, %v786
        %vm788 = vweird.f32 %v764
        %vm789 = vweird.f32 %v783
        %vm790 = vmor %vm788, %vm789
        %v791 = vsel %vm790, %v783, %v787
        %v792 = vand.u32 2147483647, %v764
        %vm793 = vcmp.eq.f32.partialorder %v792, 8.507059e+37
        %v794 = vand.u32 %v764, 2147483648
        %v795 = vor.u32 1.1754944e-38, %v794
        %v796 = vsel %vm793, %v795, %v791
        %v797 = vmul.f32 1.0, %v796
        %v798 = vrcp.pop %v765
        %v799 = vmul.f32 %v765, %v798
        %v800 = vsub.f32 1.0, %v799
        %v801 = vmul.f32 %v798, %v800
        %v802 = vadd.f32 %v798, %v801
        %vm803 = vweird.f32 %v765
        %vm804 = vweird.f32 %v798
        %vm805 = vmor %vm803, %vm804
        %v806 = vsel %vm805, %v798, %v802
        %v807 = vand.u32 2147483647, %v765
        %vm808 = vcmp.eq.f32.partialorder %v807, 8.507059e+37
        %v809 = vand.u32 %v765, 2147483648
        %v810 = vor.u32 1.1754944e-38, %v809
        %v811 = vsel %vm808, %v810, %v806
        %v812 = vmul.f32 1.0, %v811
        %v813 = vrcp.pop %v766
        %v814 = vmul.f32 %v766, %v813
        %v815 = vsub.f32 1.0, %v814
        %v816 = vmul.f32 %v813, %v815
        %v817 = vadd.f32 %v813, %v816
        %vm818 = vweird.f32 %v766
        %vm819 = vweird.f32 %v813
        %vm820 = vmor %vm818, %vm819
        %v821 = vsel %vm820, %v813, %v817
        %v822 = vand.u32 2147483647, %v766
        %vm823 = vcmp.eq.f32.partialorder %v822, 8.507059e+37
        %v824 = vand.u32 %v766, 2147483648
        %v825 = vor.u32 1.1754944e-38, %v824
        %v826 = vsel %vm823, %v825, %v821
        %v827 = vmul.f32 1.0, %v826
        %v828 = vrcp.pop %v767
        %v829 = vmul.f32 %v767, %v828
        %v830 = vsub.f32 1.0, %v829
        %v831 = vmul.f32 %v828, %v830
        %v832 = vadd.f32 %v828, %v831
        %vm833 = vweird.f32 %v767
        %vm834 = vweird.f32 %v828
        %vm835 = vmor %vm833, %vm834
        %v836 = vsel %vm835, %v828, %v832
        %v837 = vand.u32 2147483647, %v767
        %vm838 = vcmp.eq.f32.partialorder %v837, 8.507059e+37
        %v839 = vand.u32 %v767, 2147483648
        %v840 = vor.u32 1.1754944e-38, %v839
        %v841 = vsel %vm838, %v840, %v836
        %v842 = vmul.f32 1.0, %v841
        %v843 = vrcp.pop %v768
        %v844 = vmul.f32 %v768, %v843
        %v845 = vsub.f32 1.0, %v844
        %v846 = vmul.f32 %v843, %v845
        %v847 = vadd.f32 %v843, %v846
        %vm848 = vweird.f32 %v768
        %vm849 = vweird.f32 %v843
        %vm850 = vmor %vm848, %vm849
        %v851 = vsel %vm850, %v843, %v847
        %v852 = vand.u32 2147483647, %v768
        %vm853 = vcmp.eq.f32.partialorder %v852, 8.507059e+37
        %v854 = vand.u32 %v768, 2147483648
        %v855 = vor.u32 1.1754944e-38, %v854
        %v856 = vsel %vm853, %v855, %v851
        %v857 = vmul.f32 1.0, %v856
        %v858 = vrcp.pop %v769
        %v859 = vmul.f32 %v769, %v858
        %v860 = vsub.f32 1.0, %v859
        %v861 = vmul.f32 %v858, %v860
        %v862 = vadd.f32 %v858, %v861
        %vm863 = vweird.f32 %v769
        %vm864 = vweird.f32 %v858
        %vm865 = vmor %vm863, %vm864
        %v866 = vsel %vm865, %v858, %v862
        %v867 = vand.u32 2147483647, %v769
        %vm868 = vcmp.eq.f32.partialorder %v867, 8.507059e+37
        %v869 = vand.u32 %v769, 2147483648
        %v870 = vor.u32 1.1754944e-38, %v869
        %v871 = vsel %vm868, %v870, %v866
        %v872 = vmul.f32 1.0, %v871
        %v873 = vrcp.pop %v770
        %v874 = vmul.f32 %v770, %v873
        %v875 = vsub.f32 1.0, %v874
        %v876 = vmul.f32 %v873, %v875
        %v877 = vadd.f32 %v873, %v876
        %vm878 = vweird.f32 %v770
        %vm879 = vweird.f32 %v873
        %vm880 = vmor %vm878, %vm879
        %v881 = vsel %vm880, %v873, %v877
        %v882 = vand.u32 2147483647, %v770
        %vm883 = vcmp.eq.f32.partialorder %v882, 8.507059e+37
        %v884 = vand.u32 %v770, 2147483648
        %v885 = vor.u32 1.1754944e-38, %v884
        %v886 = vsel %vm883, %v885, %v881
        %v887 = vmul.f32 1.0, %v886
        %v888 = vrcp.pop %v771
        %v889 = vmul.f32 %v771, %v888
        %v890 = vsub.f32 1.0, %v889
        %v891 = vmul.f32 %v888, %v890
        %v892 = vadd.f32 %v888, %v891
        %vm893 = vweird.f32 %v771
        %vm894 = vweird.f32 %v888
        %vm895 = vmor %vm893, %vm894
        %v896 = vsel %vm895, %v888, %v892
        %v897 = vand.u32 2147483647, %v771
        %vm898 = vcmp.eq.f32.partialorder %v897, 8.507059e+37
        %v899 = vand.u32 %v771, 2147483648
        %v900 = vor.u32 1.1754944e-38, %v899
        %v901 = vsel %vm898, %v900, %v896
        %v902 = vmul.f32 1.0, %v901
        %v903 = vrcp.pop %v772
        %v904 = vmul.f32 %v772, %v903
        %v905 = vsub.f32 1.0, %v904
        %v906 = vmul.f32 %v903, %v905
        %v907 = vadd.f32 %v903, %v906
        %vm908 = vweird.f32 %v772
        %vm909 = vweird.f32 %v903
        %vm910 = vmor %vm908, %vm909
        %v911 = vsel %vm910, %v903, %v907
        %v912 = vand.u32 2147483647, %v772
        %vm913 = vcmp.eq.f32.partialorder %v912, 8.507059e+37
        %v914 = vand.u32 %v772, 2147483648
        %v915 = vor.u32 1.1754944e-38, %v914
        %v916 = vsel %vm913, %v915, %v911
        %v917 = vmul.f32 1.0, %v916
        %v918 = vrcp.pop %v773
        %v919 = vmul.f32 %v773, %v918
        %v920 = vsub.f32 1.0, %v919
        %v921 = vmul.f32 %v918, %v920
        %v922 = vadd.f32 %v918, %v921
        %vm923 = vweird.f32 %v773
        %vm924 = vweird.f32 %v918
        %vm925 = vmor %vm923, %vm924
        %v926 = vsel %vm925, %v918, %v922
        %v927 = vand.u32 2147483647, %v773
        %vm928 = vcmp.eq.f32.partialorder %v927, 8.507059e+37
        %v929 = vand.u32 %v773, 2147483648
        %v930 = vor.u32 1.1754944e-38, %v929
        %v931 = vsel %vm928, %v930, %v926
        %v932 = vmul.f32 1.0, %v931
        %v933 = vrcp.pop %v774
        %v934 = vmul.f32 %v774, %v933
        %v935 = vsub.f32 1.0, %v934
        %v936 = vmul.f32 %v933, %v935
        %v937 = vadd.f32 %v933, %v936
        %vm938 = vweird.f32 %v774
        %vm939 = vweird.f32 %v933
        %vm940 = vmor %vm938, %vm939
        %v941 = vsel %vm940, %v933, %v937
        %v942 = vand.u32 2147483647, %v774
        %vm943 = vcmp.eq.f32.partialorder %v942, 8.507059e+37
        %v944 = vand.u32 %v774, 2147483648
        %v945 = vor.u32 1.1754944e-38, %v944
        %v946 = vsel %vm943, %v945, %v941
        %v947 = vmul.f32 1.0, %v946
        %v948 = vrcp.pop %v775
        %v949 = vmul.f32 %v775, %v948
        %v950 = vsub.f32 1.0, %v949
        %v951 = vmul.f32 %v948, %v950
        %v952 = vadd.f32 %v948, %v951
        %vm953 = vweird.f32 %v775
        %vm954 = vweird.f32 %v948
        %vm955 = vmor %vm953, %vm954
        %v956 = vsel %vm955, %v948, %v952
        %v957 = vand.u32 2147483647, %v775
        %vm958 = vcmp.eq.f32.partialorder %v957, 8.507059e+37
        %v959 = vand.u32 %v775, 2147483648
        %v960 = vor.u32 1.1754944e-38, %v959
        %v961 = vsel %vm958, %v960, %v956
        %v962 = vmul.f32 1.0, %v961
        %v963 = vrcp.pop %v776
        %v964 = vmul.f32 %v776, %v963
        %v965 = vsub.f32 1.0, %v964
        %v966 = vmul.f32 %v963, %v965
        %v967 = vadd.f32 %v963, %v966
        %vm968 = vweird.f32 %v776
        %vm969 = vweird.f32 %v963
        %vm970 = vmor %vm968, %vm969
        %v971 = vsel %vm970, %v963, %v967
        %v972 = vand.u32 2147483647, %v776
        %vm973 = vcmp.eq.f32.partialorder %v972, 8.507059e+37
        %v974 = vand.u32 %v776, 2147483648
        %v975 = vor.u32 1.1754944e-38, %v974
        %v976 = vsel %vm973, %v975, %v971
        %v977 = vmul.f32 1.0, %v976
        %v978 = vrcp.pop %v777
        %v979 = vmul.f32 %v777, %v978
        %v980 = vsub.f32 1.0, %v979
        %v981 = vmul.f32 %v978, %v980
        %v982 = vadd.f32 %v978, %v981
        %vm983 = vweird.f32 %v777
        %vm984 = vweird.f32 %v978
        %vm985 = vmor %vm983, %vm984
        %v986 = vsel %vm985, %v978, %v982
        %v987 = vand.u32 2147483647, %v777
        %vm988 = vcmp.eq.f32.partialorder %v987, 8.507059e+37
        %v989 = vand.u32 %v777, 2147483648
        %v990 = vor.u32 1.1754944e-38, %v989
        %v991 = vsel %vm988, %v990, %v986
        %v992 = vmul.f32 1.0, %v991
        %v993 = vrcp.pop %v778
        %v994 = vmul.f32 %v778, %v993
        %v995 = vsub.f32 1.0, %v994
        %v996 = vmul.f32 %v993, %v995
        %v997 = vadd.f32 %v993, %v996
        %vm998 = vweird.f32 %v778
        %vm999 = vweird.f32 %v993
        %vm1000 = vmor %vm998, %vm999
        %v1001 = vsel %vm1000, %v993, %v997
        %v1002 = vand.u32 2147483647, %v778
        %vm1003 = vcmp.eq.f32.partialorder %v1002, 8.507059e+37
        %v1004 = vand.u32 %v778, 2147483648
        %v1005 = vor.u32 1.1754944e-38, %v1004
        %v1006 = vsel %vm1003, %v1005, %v1001
        %v1007 = vmul.f32 1.0, %v1006
        %v1008 = vrcp.pop %v779
        %v1009 = vmul.f32 %v779, %v1008
        %v1010 = vsub.f32 1.0, %v1009
        %v1011 = vmul.f32 %v1008, %v1010
        %v1012 = vadd.f32 %v1008, %v1011
        %vm1013 = vweird.f32 %v779
        %vm1014 = vweird.f32 %v1008
        %vm1015 = vmor %vm1013, %vm1014
        %v1016 = vsel %vm1015, %v1008, %v1012
        %v1017 = vand.u32 2147483647, %v779
        %vm1018 = vcmp.eq.f32.partialorder %v1017, 8.507059e+37
        %v1019 = vand.u32 %v779, 2147483648
        %v1020 = vor.u32 1.1754944e-38, %v1019
        %v1021 = vsel %vm1018, %v1020, %v1016
        %v1022 = vmul.f32 1.0, %v1021
        %v1023 = vrcp.pop %v780
        %v1024 = vmul.f32 %v780, %v1023
        %v1025 = vsub.f32 1.0, %v1024
        %v1026 = vmul.f32 %v1023, %v1025
        %v1027 = vadd.f32 %v1023, %v1026
        %vm1028 = vweird.f32 %v780
        %vm1029 = vweird.f32 %v1023
        %vm1030 = vmor %vm1028, %vm1029
        %v1031 = vsel %vm1030, %v1023, %v1027
        %v1032 = vand.u32 2147483647, %v780
        %vm1033 = vcmp.eq.f32.partialorder %v1032, 8.507059e+37
        %v1034 = vand.u32 %v780, 2147483648
        %v1035 = vor.u32 1.1754944e-38, %v1034
        %v1036 = vsel %vm1033, %v1035, %v1031
        %v1037 = vmul.f32 1.0, %v1036
        %v1038 = vrcp.pop %v781
        %v1039 = vmul.f32 %v781, %v1038
        %v1040 = vsub.f32 1.0, %v1039
        %v1041 = vmul.f32 %v1038, %v1040
        %v1042 = vadd.f32 %v1038, %v1041
        %vm1043 = vweird.f32 %v781
        %vm1044 = vweird.f32 %v1038
        %vm1045 = vmor %vm1043, %vm1044
        %v1046 = vsel %vm1045, %v1038, %v1042
        %v1047 = vand.u32 2147483647, %v781
        %vm1048 = vcmp.eq.f32.partialorder %v1047, 8.507059e+37
        %v1049 = vand.u32 %v781, 2147483648
        %v1050 = vor.u32 1.1754944e-38, %v1049
        %v1051 = vsel %vm1048, %v1050, %v1046
        %v1052 = vmul.f32 1.0, %v1051
        %v1053 = vrcp.pop %v782
        %v1054 = vmul.f32 %v782, %v1053
        %v1055 = vsub.f32 1.0, %v1054
        %v1056 = vmul.f32 %v1053, %v1055
        %v1057 = vadd.f32 %v1053, %v1056
        %vm1058 = vweird.f32 %v782
        %vm1059 = vweird.f32 %v1053
        %vm1060 = vmor %vm1058, %vm1059
        %v1061 = vsel %vm1060, %v1053, %v1057
        %v1062 = vand.u32 2147483647, %v782
        %vm1063 = vcmp.eq.f32.partialorder %v1062, 8.507059e+37
        %v1064 = vand.u32 %v782, 2147483648
        %v1065 = vor.u32 1.1754944e-38, %v1064
        %v1066 = vsel %vm1063, %v1065, %v1061
        %v1067 = vmul.f32 1.0, %v1066
        %v1068 = vmul.f32 %v688, %v797
        %v1069 = vmul.f32 %v689, %v812
        %v1070 = vmul.f32 %v690, %v827
        %v1071 = vmul.f32 %v691, %v842
        %v1072 = vmul.f32 %v692, %v857
        %v1073 = vmul.f32 %v693, %v872
        %v1074 = vmul.f32 %v694, %v887
        %v1075 = vmul.f32 %v695, %v902
        %v1076 = vmul.f32 %v696, %v917
        %v1077 = vmul.f32 %v697, %v932
        %v1078 = vmul.f32 %v698, %v947
        %v1079 = vmul.f32 %v699, %v962
        %v1080 = vmul.f32 %v700, %v977
        %v1081 = vmul.f32 %v701, %v992
        %v1082 = vmul.f32 %v702, %v1007
        %v1083 = vmul.f32 %v703, %v1022
        %v1084 = vmul.f32 %v704, %v1037
        %v1085 = vmul.f32 %v705, %v1052
        %v1086 = vmul.f32 %v706, %v1067
        %v1087 = vld [vmem:[#allocation8] sm:$0xff]
        %v1088 = vld [vmem:[#allocation8 + $0x8] sm:$0xff]
        %v1089 = vld [vmem:[#allocation8 + $0x10] sm:$0xff]
        %v1090 = vld [vmem:[#allocation8 + $0x18] sm:$0xff]
        %v1091 = vld [vmem:[#allocation8 + $0x20] sm:$0xff]
        %v1092 = vld [vmem:[#allocation8 + $0x28] sm:$0xff]
        %v1093 = vld [vmem:[#allocation8 + $0x30] sm:$0xff]
        %v1094 = vld [vmem:[#allocation8 + $0x38] sm:$0xff]
        %v1095 = vld [vmem:[#allocation8 + $0x40] sm:$0xff]
        %v1096 = vld [vmem:[#allocation8 + $0x48] sm:$0xff]
        %v1097 = vld [vmem:[#allocation8 + $0x50] sm:$0xff]
        %v1098 = vld [vmem:[#allocation8 + $0x58] sm:$0xff]
        %v1099 = vld [vmem:[#allocation8 + $0x60] sm:$0xff]
        %v1100 = vld [vmem:[#allocation8 + $0x68] sm:$0xff]
        %v1101 = vld [vmem:[#allocation8 + $0x70] sm:$0xff]
        %v1102 = vld [vmem:[#allocation8 + $0x78] sm:$0xff]
        %v1103 = vpack.c.bf16 %v1069, %v1068
        %v1104 = vpack.c.bf16 %v1071, %v1070
        %v1105 = vpack.c.bf16 %v1073, %v1072
        %v1106 = vpack.c.bf16 %v1075, %v1074
        %v1107 = vpack.c.bf16 %v1077, %v1076
        %v1108 = vpack.c.bf16 %v1079, %v1078
        %v1109 = vpack.c.bf16 %v1081, %v1080
        %v1110 = vpack.c.bf16 %v1083, %v1082
        %v1111 = vpack.c.bf16 %v1085, %v1084
        %v1112 = vpack.c.bf16 %v1086, %v1086
        %v1113 = vpack.c.bf16 %v1088, %v1087
        %v1114 = vpack.c.bf16 %v1090, %v1089
        %v1115 = vpack.c.bf16 %v1092, %v1091
        %v1116 = vpack.c.bf16 %v1094, %v1093
        %v1117 = vpack.c.bf16 %v1096, %v1095
        %v1118 = vpack.c.bf16 %v1098, %v1097
        %v1119 = vpack.c.bf16 %v1100, %v1099
        %v1120 = vpack.c.bf16 %v1102, %v1101
        %v1121 = vld [vmem:[%s4] sm:$0x1]
        %v1123 = vperm.slane %v1121, 0
        %1125 = vmatpush.bf16.msra.mxu0 %v1120
        %1126 = vmatpush.bf16.msra.mxu0 %v1119
        %1127 = vmatpush.bf16.msra.mxu0 %v1118
        %1128 = vmatpush.bf16.msra.mxu0 %v1117
        %1129 = vmatpush.bf16.msra.mxu0 %v1116
        %1130 = vmatpush.bf16.msra.mxu0 %v1115
        %1131 = vmatpush.bf16.msra.mxu0 %v1114
        %1132 = vmatpush.bf16.msra.mxu0 %v1113
        %1133 = vmatmul.bf16.gmra.mxu0 %v1103
        %v1134 = vpop.f32.mrf.mxu0
        %v1135 = vadd.f32 %v1123, %v1134
        %v1136 = vpop.f32.mrf.mxu0
        %v1137 = vadd.f32 %v1123, %v1136
        %1138 = vmatmul.bf16.gmra.mxu0 %v1104
        %v1139 = vpop.f32.mrf.mxu0
        %v1140 = vadd.f32 %v1123, %v1139
        %v1141 = vpop.f32.mrf.mxu0
        %v1142 = vadd.f32 %v1123, %v1141
        %1143 = vmatmul.bf16.gmra.mxu0 %v1105
        %v1144 = vpop.f32.mrf.mxu0
        %v1145 = vadd.f32 %v1123, %v1144
        %v1146 = vpop.f32.mrf.mxu0
        %v1147 = vadd.f32 %v1123, %v1146
        %1148 = vmatmul.bf16.gmra.mxu0 %v1106
        %v1149 = vpop.f32.mrf.mxu0
        %v1150 = vadd.f32 %v1123, %v1149
        %v1151 = vpop.f32.mrf.mxu0
        %v1152 = vadd.f32 %v1123, %v1151
        %1153 = vmatmul.bf16.gmra.mxu0 %v1107
        %v1154 = vpop.f32.mrf.mxu0
        %v1155 = vadd.f32 %v1123, %v1154
        %v1156 = vpop.f32.mrf.mxu0
        %v1157 = vadd.f32 %v1123, %v1156
        %1158 = vmatmul.bf16.gmra.mxu0 %v1108
        %v1159 = vpop.f32.mrf.mxu0
        %v1160 = vadd.f32 %v1123, %v1159
        %v1161 = vpop.f32.mrf.mxu0
        %v1162 = vadd.f32 %v1123, %v1161
        %1163 = vmatmul.bf16.gmra.mxu0 %v1109
        %v1164 = vpop.f32.mrf.mxu0
        %v1165 = vadd.f32 %v1123, %v1164
        %v1166 = vpop.f32.mrf.mxu0
        %v1167 = vadd.f32 %v1123, %v1166
        %1168 = vmatmul.bf16.gmra.mxu0 %v1110
        %v1169 = vpop.f32.mrf.mxu0
        %v1170 = vadd.f32 %v1123, %v1169
        %v1171 = vpop.f32.mrf.mxu0
        %v1172 = vadd.f32 %v1123, %v1171
        %1173 = vmatmul.bf16.gmra.mxu0 %v1111
        %v1174 = vpop.f32.mrf.mxu0
        %v1175 = vadd.f32 %v1123, %v1174
        %v1176 = vpop.f32.mrf.mxu0
        %v1177 = vadd.f32 %v1123, %v1176
        %1178 = vmatmul.bf16.gmra.mxu0 %v1112
        %v1179 = vpop.f32.mrf.mxu0
        %v1180 = vadd.f32 %v1123, %v1179
        %v1181 = vpop.f32.mrf.mxu0
        %1182 = vdwg.mxu0
        %1183 = vst [vmem:[%s293] sm:$0xff] %v1135
        %1184 = vst [vmem:[%s293 + $0x8] sm:$0xff] %v1137
        %1185 = vst [vmem:[%s293 + $0x10] sm:$0xff] %v1140
        %1186 = vst [vmem:[%s293 + $0x18] sm:$0xff] %v1142
        %1187 = vst [vmem:[%s293 + $0x20] sm:$0xff] %v1145
        %1188 = vst [vmem:[%s293 + $0x28] sm:$0xff] %v1147
        %1189 = vst [vmem:[%s293 + $0x30] sm:$0xff] %v1150
        %1190 = vst [vmem:[%s293 + $0x38] sm:$0xff] %v1152
        %1191 = vst [vmem:[%s293 + $0x40] sm:$0xff] %v1155
        %1192 = vst [vmem:[%s293 + $0x48] sm:$0xff] %v1157
        %1193 = vst [vmem:[%s293 + $0x50] sm:$0xff] %v1160
        %1194 = vst [vmem:[%s293 + $0x58] sm:$0xff] %v1162
        %1195 = vst [vmem:[%s293 + $0x60] sm:$0xff] %v1165
        %1196 = vst [vmem:[%s293 + $0x68] sm:$0xff] %v1167
        %1197 = vst [vmem:[%s293 + $0x70] sm:$0xff] %v1170
        %1198 = vst [vmem:[%s293 + $0x78] sm:$0xff] %v1172
        %1199 = vst [vmem:[%s293 + $0x80] sm:$0xff] %v1175
        %1200 = vst [vmem:[%s293 + $0x88] sm:$0xff] %v1177
        %1201 = vst [vmem:[%s293 + $0x90] sm:$0xff] %v1180
        %s1202 = sand.u32 %s142, 1
        %s1203 = scalar_lea.sflag [#allocation4], %s1202
        %s1204 = sand.u32 %s142, 1
        %s1205 = smul.addr %s1204, 152
        %s1206 = scalar_lea.vmem [#allocation10], %s1205
        // Predicated region
        $region57: #{tpu_custom_call.1} parent=39 // pred_check
          %p1207 = pneg %p152
        $region58: #{tpu_custom_call.1} parent=39 // pred_check_branch
          %1209 = sbr.rel (%p1207) target = $region60
        $region59: #{tpu_custom_call.1} parent=39 // pred_region
          %s1210 = smul.u32 19, %s24
          %1212 = vsyncadd %s1203, 0
          %s1213 = smul.addr %s1210, 8
          %s1214 = scalar_lea.hbm %s5, %s1213
          %s1215 = sshll.u32 %s1206, 4
          %s1216 = int_to_ptr.vmem [resolvable:$true] %s1215
          %s1217 = sshll.u32 %s1214, 4
          %s1218 = int_to_ptr.hbm [resolvable:$true] %s1217
          %1223 = dma.vmem_to_hbm [thread:$0]  %s1216, 2432, %s1218, %s1203, 128, 128, 8
        $region60: #{tpu_custom_call.1} parent=39 // pred_fallthru
          _
      $region40: #{tpu_custom_call.1} parent=5 // pred_fallthru
        _
      %p1224 = scmp.le.s32.totalorder 2, %s19
      // Predicated region
      $region61: #{tpu_custom_call.1} parent=5 // pred_check
        %p1225 = pneg %p1224
      $region62: #{tpu_custom_call.1} parent=5 // pred_check_branch
        %1227 = sbr.rel (%p1225) target = $region64
      $region63: #{tpu_custom_call.1} parent=5 // pred_region
        %s1228 = ssub.s32 %s19, 2
        // Predicated region
        $region65: #{tpu_custom_call.1} parent=63 // pred_check
          %p1229 = pneg %p158
        $region66: #{tpu_custom_call.1} parent=63 // pred_check_branch
          %1231 = sbr.rel (%p1229) target = $region68
        $region67: #{tpu_custom_call.1} parent=63 // pred_region
          %s1232 = sand.u32 %s143, 1
          %s1233 = scalar_lea.sflag [#allocation4], %s1232
          %s1234 = sand.u32 %s143, 1
          %s1235 = smul.addr %s1234, 152
          %s1236 = scalar_lea.vmem [#allocation10], %s1235
          %1238 = dma.done %s1233, 2432
        $region68: #{tpu_custom_call.1} parent=63 // pred_fallthru
          _
      $region64: #{tpu_custom_call.1} parent=5 // pred_fallthru
        _
    $region6: #{tpu_custom_call.1} parent=1 // loop_footer
      %s23 = sadd.s32 1, %s19
    $region7: #{tpu_custom_call.1} parent=1 // loop_footer_branch
      %18 = sbr.rel target = $region3
    $region8: #{tpu_custom_call.1} parent=1 // loop_exit
      _
    %1239 = vsyncpa [#allocation3], 1
    %s1240 = scalar_lea.sflag [#allocation3], 1
    %1241 = vsyncpa %s1240, 1
    %1242 = vsyncpa [#allocation6], 1
    %1243 = vsyncpa [#allocation9], 1
    %1244 = vsyncpa [#allocation4], 1
    %s1245 = scalar_lea.sflag [#allocation4], 1
    %1246 = vsyncpa %s1245, 1

</llo_original>
